<compile_context>
chip_gen: v6e
topology: v6e:2x2x1
jax: 0.10.0
libtpu: 0.0.40
codegen_flags: <defaults>
</compile_context>

<pallas_src>
import functools

import jax
import jax.numpy as jnp
from jax.experimental import pallas as pl
from jax.experimental.pallas import tpu as pltpu

IN_DIM = 1 * 28 * 28   # 784
HID = 20
OUT = 10
HID_PAD = 128          # hidden lanes padded to a full vreg lane width
OUT_PAD = 128          # output lanes padded -> unmasked 128-lane stores
NEG_BIG = -1e30        # padding bias for fake logits (never wins max / logsumexp)


def _round_up(n, m):
    return (n + m - 1) // m * m


def mlp_kernel(x_ref, w1_ref, b1_ref, w2_ref, b2_ref, o_ref):
    # x_ref: (TB, 784)    w1_ref: (784, 128)  b1_ref: (1, 128)
    # w2_ref: (128, 128)  b2_ref: (1, 128)    o_ref: (TB, 128)
    x = x_ref[...]

    # Layer 1: Linear + Tanh (MXU matmul, f32 accumulate; padded hidden lanes stay 0,
    # tanh runs on the EUP).
    h = jnp.tanh(
        jnp.dot(x, w1_ref[...], preferred_element_type=jnp.float32) + b1_ref[...]
    )

    # Layer 2: Linear.  Padded output lanes get logit = -1e30 (from the padded bias).
    logits = jnp.dot(h, w2_ref[...], preferred_element_type=jnp.float32) + b2_ref[...]

    # LogSoftmax over the feature axis, numerically stable.  The -1e30 padded lanes
    # never affect the row max or the logsumexp (their exp underflows to exactly 0).
    m = jnp.max(logits, axis=-1, keepdims=True)
    shifted = logits - m
    lse = jnp.log(jnp.sum(jnp.exp(shifted), axis=-1, keepdims=True))
    o_ref[...] = (shifted - lse).astype(o_ref.dtype)


@functools.partial(jax.jit, static_argnames=("tile_rows",))
def mlp_forward(x, w1, b1, w2, b2, *, tile_rows=1024):
    """x: (B, 1, 28, 28) or (B, 784).  w1: (784, 20), b1: (1, 20) or (20,),
    w2: (20, 10), b2: (1, 10) or (10,).  Returns (B, 10) log-probabilities."""
    xf = x.reshape(-1, IN_DIM).astype(jnp.float32)
    B = xf.shape[0]

    # --- Pad weights once (tiny; fused into the surrounding XLA program). ---
    w1p = jnp.zeros((IN_DIM, HID_PAD), jnp.float32).at[:, :HID].set(w1)
    b1p = jnp.zeros((1, HID_PAD), jnp.float32).at[:, :HID].set(b1.reshape(1, HID))
    w2p = jnp.zeros((HID_PAD, OUT_PAD), jnp.float32).at[:HID, :OUT].set(w2)
    b2p = jnp.full((1, OUT_PAD), NEG_BIG, jnp.float32).at[:, :OUT].set(
        b2.reshape(1, OUT))

    # --- Batch tiling: TB rows per grid step (multiple of 8 sublanes). ---
    TB = min(_round_up(tile_rows, 8), _round_up(B, 8))
    Bp = _round_up(B, TB)
    if Bp != B:
        xf = jnp.pad(xf, ((0, Bp - B), (0, 0)))
    n_tiles = Bp // TB

    cost = pl.CostEstimate(
        flops=2 * Bp * (IN_DIM * HID_PAD + HID_PAD * OUT_PAD),
        transcendentals=Bp * (HID_PAD + OUT_PAD),
        bytes_accessed=4 * (Bp * IN_DIM + IN_DIM * HID_PAD + HID_PAD * OUT_PAD
                            + Bp * OUT_PAD),
    )

    out = pl.pallas_call(
        mlp_kernel,
        out_shape=jax.ShapeDtypeStruct((Bp, OUT_PAD), jnp.float32),
        grid=(n_tiles,),
        in_specs=[
            pl.BlockSpec((TB, IN_DIM), lambda i: (i, 0)),       # streamed per tile
            pl.BlockSpec((IN_DIM, HID_PAD), lambda i: (0, 0)),  # resident weights
            pl.BlockSpec((1, HID_PAD), lambda i: (0, 0)),
            pl.BlockSpec((HID_PAD, OUT_PAD), lambda i: (0, 0)),
            pl.BlockSpec((1, OUT_PAD), lambda i: (0, 0)),
        ],
        out_specs=pl.BlockSpec((TB, OUT_PAD), lambda i: (i, 0)),
        compiler_params=pltpu.CompilerParams(
            dimension_semantics=("parallel",),   # shard batch tiles across TCs on v7x
        ),
        cost_estimate=cost,
    )(xf, w1p, b1p, w2p, b2p)

    # Drop padded batch rows and padded output lanes.
    return out[:B, :OUT]


def mlp_reference(x, w1, b1, w2, b2):
    # Pure-JAX reference of the PyTorch forward pass (weights already (in, out)).
    xf = x.reshape(-1, IN_DIM).astype(jnp.float32)
    h = jnp.tanh(xf @ w1 + b1.reshape(1, HID))
    logits = h @ w2 + b2.reshape(1, OUT)
    return jax.nn.log_softmax(logits, axis=-1)


def init_params(key):
    # Deterministic init mimicking nn.Linear's uniform(-1/sqrt(fan_in), 1/sqrt(fan_in)).
    k1, k2, k3, k4 = jax.random.split(key, 4)
    bound1 = 1.0 / jnp.sqrt(IN_DIM)
    bound2 = 1.0 / jnp.sqrt(HID)
    # Stored as (in, out)  (transposed w.r.t. PyTorch's (out, in) weight layout).
    w1 = jax.random.uniform(k1, (IN_DIM, HID), jnp.float32, -bound1, bound1)
    b1 = jax.random.uniform(k2, (1, HID), jnp.float32, -bound1, bound1)
    w2 = jax.random.uniform(k3, (HID, OUT), jnp.float32, -bound2, bound2)
    b2 = jax.random.uniform(k4, (1, OUT), jnp.float32, -bound2, bound2)
    return w1, b1, w2, b2


if __name__ == "__main__":
    key = jax.random.PRNGKey(0)
    kx, kp = jax.random.split(key)

    # Small, deterministic example (B=12 also exercises the batch-padding path).
    B = 12
    x = jax.random.normal(kx, (B, 1, 28, 28), jnp.float32)  # NCHW like MNIST input
    w1, b1, w2, b2 = init_params(kp)

    out = mlp_forward(x, w1, b1, w2, b2)
    out = jax.block_until_ready(out)

    # Correctness: shape, prob-simplex sanity, and match vs. the pure-JAX reference.
    assert out.shape == (B, OUT)
    probs_sum = jnp.sum(jnp.exp(out), axis=-1)
    assert bool(jnp.all(jnp.abs(probs_sum - 1.0) < 1e-4))
    ref = mlp_reference(x, w1, b1, w2, b2)
    assert bool(jnp.all(jnp.abs(out - ref) < 1e-4))

    print("KERNEL_OK")
</pallas_src>

<mosaic_0001>
module attributes {stable_mosaic.version = 11 : i64} {
  func.func @mlp_kernel(%arg0: i32, %arg1: memref<16x784xf32, #tpu.memory_space<vmem>>, %arg2: memref<784x128xf32, #tpu.memory_space<vmem>>, %arg3: memref<1x128xf32, #tpu.memory_space<vmem>>, %arg4: memref<128x128xf32, #tpu.memory_space<vmem>>, %arg5: memref<1x128xf32, #tpu.memory_space<vmem>>, %arg6: memref<16x128xf32, #tpu.memory_space<vmem>>) attributes {dimension_semantics = [#tpu.dimension_semantics<parallel>], iteration_bounds = array<i64: 1>, scalar_prefetch = 0 : i64, scratch_operands = 0 : i64, tpu.core_type = #tpu.core_type<tc>, window_params = [{transform_indices = @transform_0, window_bounds = array<i64: 16, 784>}, {pipeline_mode = #tpu.pipeline_mode<synchronous>, transform_indices = @transform_1, window_bounds = array<i64: 784, 128>}, {pipeline_mode = #tpu.pipeline_mode<synchronous>, transform_indices = @transform_2, window_bounds = array<i64: 1, 128>}, {pipeline_mode = #tpu.pipeline_mode<synchronous>, transform_indices = @transform_3, window_bounds = array<i64: 128, 128>}, {pipeline_mode = #tpu.pipeline_mode<synchronous>, transform_indices = @transform_4, window_bounds = array<i64: 1, 128>}, {transform_indices = @transform_5, window_bounds = array<i64: 16, 128>}]} {
    %c0 = arith.constant 0 : index
    %c0_0 = arith.constant 0 : index
    %0 = vector.load %arg1[%c0, %c0_0] : memref<16x784xf32, #tpu.memory_space<vmem>>, vector<16x784xf32>
    %c0_1 = arith.constant 0 : index
    %c0_2 = arith.constant 0 : index
    %1 = vector.load %arg2[%c0_1, %c0_2] : memref<784x128xf32, #tpu.memory_space<vmem>>, vector<784x128xf32>
    %cst = arith.constant dense<0.000000e+00> : vector<16x128xf32>
    %2 = tpu.matmul %0, %1, %cst {dimension_numbers = #tpu.dot_dimension_numbers<[1], [0], [0], [1], [0, 0, 1, 1], [], []>} : vector<16x784xf32>, vector<784x128xf32>, vector<16x128xf32> -> vector<16x128xf32>
    %c0_3 = arith.constant 0 : index
    %c0_4 = arith.constant 0 : index
    %3 = vector.load %arg3[%c0_3, %c0_4] : memref<1x128xf32, #tpu.memory_space<vmem>>, vector<1x128xf32>
    %4 = vector.broadcast %3 : vector<1x128xf32> to vector<16x128xf32>
    %5 = arith.addf %2, %4 : vector<16x128xf32>
    %6 = math.tanh %5 : vector<16x128xf32>
    %c0_5 = arith.constant 0 : index
    %c0_6 = arith.constant 0 : index
    %7 = vector.load %arg4[%c0_5, %c0_6] : memref<128x128xf32, #tpu.memory_space<vmem>>, vector<128x128xf32>
    %cst_7 = arith.constant dense<0.000000e+00> : vector<16x128xf32>
    %8 = tpu.matmul %6, %7, %cst_7 {dimension_numbers = #tpu.dot_dimension_numbers<[1], [0], [0], [1], [0, 0, 1, 1], [], []>} : vector<16x128xf32>, vector<128x128xf32>, vector<16x128xf32> -> vector<16x128xf32>
    %c0_8 = arith.constant 0 : index
    %c0_9 = arith.constant 0 : index
    %9 = vector.load %arg5[%c0_8, %c0_9] : memref<1x128xf32, #tpu.memory_space<vmem>>, vector<1x128xf32>
    %10 = vector.broadcast %9 : vector<1x128xf32> to vector<16x128xf32>
    %11 = arith.addf %8, %10 : vector<16x128xf32>
    %cst_10 = arith.constant dense<0xFF800000> : vector<16xf32>
    %12 = vector.multi_reduction <maximumf>, %11, %cst_10 [1] : vector<16x128xf32> to vector<16xf32>
    %13 = vector.shape_cast %12 : vector<16xf32> to vector<16x1xf32>
    %14 = vector.broadcast %13 : vector<16x1xf32> to vector<16x128xf32>
    %15 = arith.subf %11, %14 : vector<16x128xf32>
    %16 = math.exp %15 : vector<16x128xf32>
    %cst_11 = arith.constant dense<0.000000e+00> : vector<16xf32>
    %17 = vector.multi_reduction <add>, %16, %cst_11 [1] : vector<16x128xf32> to vector<16xf32>
    %18 = vector.shape_cast %17 : vector<16xf32> to vector<16x1xf32>
    %19 = math.log %18 : vector<16x1xf32>
    %20 = vector.broadcast %19 : vector<16x1xf32> to vector<16x128xf32>
    %21 = arith.subf %15, %20 : vector<16x128xf32>
    %c0_12 = arith.constant 0 : index
    %c0_13 = arith.constant 0 : index
    %22 = vector.load %arg6[%c0_12, %c0_13] : memref<16x128xf32, #tpu.memory_space<vmem>>, vector<16x128xf32>
    tpu.vector_store %arg6[%c0_12, %c0_13], %21 {strides = array<i32>} : memref<16x128xf32, #tpu.memory_space<vmem>>, vector<16x128xf32>,
    return
  }
  func.func @transform_0(%arg0: i32) -> (i32, i32) {
    %c0_i32 = arith.constant 0 : i32
    %c0_i32_0 = arith.constant 0 : i32
    return %arg0, %c0_i32 : i32, i32
  }
  func.func @transform_1(%arg0: i32) -> (i32, i32) {
    %c0_i32 = arith.constant 0 : i32
    %c0_i32_0 = arith.constant 0 : i32
    %c0_i32_1 = arith.constant 0 : i32
    return %c0_i32, %c0_i32_0 : i32, i32
  }
  func.func @transform_2(%arg0: i32) -> (i32, i32) {
    %c0_i32 = arith.constant 0 : i32
    %c0_i32_0 = arith.constant 0 : i32
    %c0_i32_1 = arith.constant 0 : i32
    return %c0_i32, %c0_i32_0 : i32, i32
  }
  func.func @transform_3(%arg0: i32) -> (i32, i32) {
    %c0_i32 = arith.constant 0 : i32
    %c0_i32_0 = arith.constant 0 : i32
    %c0_i32_1 = arith.constant 0 : i32
    return %c0_i32, %c0_i32_0 : i32, i32
  }
  func.func @transform_4(%arg0: i32) -> (i32, i32) {
    %c0_i32 = arith.constant 0 : i32
    %c0_i32_0 = arith.constant 0 : i32
    %c0_i32_1 = arith.constant 0 : i32
    return %c0_i32, %c0_i32_0 : i32, i32
  }
  func.func @transform_5(%arg0: i32) -> (i32, i32) {
    %c0_i32 = arith.constant 0 : i32
    %c0_i32_0 = arith.constant 0 : i32
    return %arg0, %c0_i32 : i32, i32
  }
}

</mosaic_0001>

<llo_original>
// kernel: mlp_forward.1
$region0: #{mlp_forward.1}
  #allocation0 [shape = 'u32[]', space=smem, size = 0x4, offset = 0x4, fixed_abs, tag = 'smem constant byte address 0x4 - core index']
  #allocation1 [shape = 'u32[144,128]{1,0:T(1,128)}', space=vmem, size = 0x12000, scoped, tag = 'internal scratch']
  %s0 = inlined_call_operand.vmem [shape: f32[16,784], index: 0, kind: input, shape index: {}]
  %s1 = inlined_call_operand.vmem [shape: f32[784,128], index: 1, kind: input, shape index: {}]
  %s2 = inlined_call_operand.vmem [shape: f32[1,128], index: 2, kind: input, shape index: {}]
  %s3 = inlined_call_operand.vmem [shape: f32[128,128], index: 3, kind: input, shape index: {}]
  %s4 = inlined_call_operand.vmem [shape: f32[1,128], index: 4, kind: input, shape index: {}]
  %s5 = inlined_call_operand.hbm [shape: f32[16,128], index: 5, kind: output, shape index: {}]
  %s6 = sld [smem:[#allocation0]]
  $region30: #{mlp_forward.1} parent=0
    _
  %s8 = ssub.s32 1, %s6
  %s9 = scalar_select 0, %s8, %s6
  $region1: #{mlp_forward.1} parent=0
    #allocation2 [shape = 'u8[8192]{0}', space=vmem, size = 0x2000, scoped, tag = 'output window, operand 0, single buffered']
    #allocation3 [shape = 's32[1]{0}', space=sflag, size = 0x4, scoped, tag = 'scoped memory for mlp_forward.1']
    %10 = vsyncpa [#allocation3], 0
    // Predicated region
    $region2: #{mlp_forward.1} parent=1 // pred_check
      _
    $region3: #{mlp_forward.1} parent=1 // pred_check_branch
      %12 = sbr.rel (0) target = $region5
    $region4: #{mlp_forward.1} parent=1 // pred_region
      _
    $region5: #{mlp_forward.1} parent=1 // pred_fallthru
      _
    // Predicated region
    $region6: #{mlp_forward.1} parent=1 // pred_check
      _
    $region7: #{mlp_forward.1} parent=1 // pred_check_branch
      %14 = sbr.rel (0) target = $region9
    $region8: #{mlp_forward.1} parent=1 // pred_region
      _
    $region9: #{mlp_forward.1} parent=1 // pred_fallthru
      _
    // Predicated region
    $region10: #{mlp_forward.1} parent=1 // pred_check
      _
    $region11: #{mlp_forward.1} parent=1 // pred_check_branch
      %16 = sbr.rel (0) target = $region13
    $region12: #{mlp_forward.1} parent=1 // pred_region
      _
    $region13: #{mlp_forward.1} parent=1 // pred_fallthru
      _
    // Predicated region
    $region14: #{mlp_forward.1} parent=1 // pred_check
      _
    $region15: #{mlp_forward.1} parent=1 // pred_check_branch
      %18 = sbr.rel (0) target = $region17
    $region16: #{mlp_forward.1} parent=1 // pred_region
      _
    $region17: #{mlp_forward.1} parent=1 // pred_fallthru
      _
    // Predicated region
    $region18: #{mlp_forward.1} parent=1 // pred_check
      _
    $region19: #{mlp_forward.1} parent=1 // pred_check_branch
      %20 = sbr.rel (0) target = $region21
    $region20: #{mlp_forward.1} parent=1 // pred_region
      _
    $region21: #{mlp_forward.1} parent=1 // pred_fallthru
      _
    %v21 = vld [vmem:[%s0] sm:$0xff]
    %v22 = vld [vmem:[%s0 + $0x8] sm:$0xff]
    %v23 = vld [vmem:[%s0 + $0x10] sm:$0xff]
    %v24 = vld [vmem:[%s0 + $0x18] sm:$0xff]
    %v25 = vld [vmem:[%s0 + $0x20] sm:$0xff]
    %v26 = vld [vmem:[%s0 + $0x28] sm:$0xff]
    %v27 = vld [vmem:[%s0 + $0x30] sm:$0xff]
    %v28 = vld [vmem:[%s0 + $0x38] sm:$0xff]
    %v29 = vld [vmem:[%s0 + $0x40] sm:$0xff]
    %v30 = vld [vmem:[%s0 + $0x48] sm:$0xff]
    %v31 = vld [vmem:[%s0 + $0x50] sm:$0xff]
    %v32 = vld [vmem:[%s0 + $0x58] sm:$0xff]
    %v33 = vld [vmem:[%s0 + $0x60] sm:$0xff]
    %v34 = vld [vmem:[%s0 + $0x68] sm:$0xff]
    %v35 = vld [vmem:[%s1] sm:$0xff]
    %v36 = vld [vmem:[%s1 + $0x8] sm:$0xff]
    %v37 = vld [vmem:[%s1 + $0x10] sm:$0xff]
    %v38 = vld [vmem:[%s1 + $0x18] sm:$0xff]
    %v39 = vld [vmem:[%s1 + $0x20] sm:$0xff]
    %v40 = vld [vmem:[%s1 + $0x28] sm:$0xff]
    %v41 = vld [vmem:[%s1 + $0x30] sm:$0xff]
    %v42 = vld [vmem:[%s1 + $0x38] sm:$0xff]
    %v43 = vld [vmem:[%s1 + $0x40] sm:$0xff]
    %v44 = vld [vmem:[%s1 + $0x48] sm:$0xff]
    %v45 = vld [vmem:[%s1 + $0x50] sm:$0xff]
    %v46 = vld [vmem:[%s1 + $0x58] sm:$0xff]
    %v47 = vld [vmem:[%s1 + $0x60] sm:$0xff]
    %v48 = vld [vmem:[%s1 + $0x68] sm:$0xff]
    %v49 = vld [vmem:[%s1 + $0x70] sm:$0xff]
    %v50 = vld [vmem:[%s1 + $0x78] sm:$0xff]
    %v51 = vld [vmem:[%s1 + $0x80] sm:$0xff]
    %v52 = vld [vmem:[%s1 + $0x88] sm:$0xff]
    %v53 = vld [vmem:[%s1 + $0x90] sm:$0xff]
    %v54 = vld [vmem:[%s1 + $0x98] sm:$0xff]
    %v55 = vld [vmem:[%s1 + $0xa0] sm:$0xff]
    %v56 = vld [vmem:[%s1 + $0xa8] sm:$0xff]
    %v57 = vld [vmem:[%s1 + $0xb0] sm:$0xff]
    %v58 = vld [vmem:[%s1 + $0xb8] sm:$0xff]
    %v59 = vld [vmem:[%s1 + $0xc0] sm:$0xff]
    %v60 = vld [vmem:[%s1 + $0xc8] sm:$0xff]
    %v61 = vld [vmem:[%s1 + $0xd0] sm:$0xff]
    %v62 = vld [vmem:[%s1 + $0xd8] sm:$0xff]
    %v63 = vld [vmem:[%s1 + $0xe0] sm:$0xff]
    %v64 = vld [vmem:[%s1 + $0xe8] sm:$0xff]
    %v65 = vld [vmem:[%s1 + $0xf0] sm:$0xff]
    %v66 = vld [vmem:[%s1 + $0xf8] sm:$0xff]
    %v67 = vld [vmem:[%s1 + $0x100] sm:$0xff]
    %v68 = vld [vmem:[%s1 + $0x108] sm:$0xff]
    %v69 = vld [vmem:[%s1 + $0x110] sm:$0xff]
    %v70 = vld [vmem:[%s1 + $0x118] sm:$0xff]
    %v71 = vld [vmem:[%s1 + $0x120] sm:$0xff]
    %v72 = vld [vmem:[%s1 + $0x128] sm:$0xff]
    %v73 = vld [vmem:[%s1 + $0x130] sm:$0xff]
    %v74 = vld [vmem:[%s1 + $0x138] sm:$0xff]
    %v75 = vld [vmem:[%s1 + $0x140] sm:$0xff]
    %v76 = vld [vmem:[%s1 + $0x148] sm:$0xff]
    %v77 = vld [vmem:[%s1 + $0x150] sm:$0xff]
    %v78 = vld [vmem:[%s1 + $0x158] sm:$0xff]
    %v79 = vld [vmem:[%s1 + $0x160] sm:$0xff]
    %v80 = vld [vmem:[%s1 + $0x168] sm:$0xff]
    %v81 = vld [vmem:[%s1 + $0x170] sm:$0xff]
    %v82 = vld [vmem:[%s1 + $0x178] sm:$0xff]
    %v83 = vld [vmem:[%s1 + $0x180] sm:$0xff]
    %v84 = vld [vmem:[%s1 + $0x188] sm:$0xff]
    %v85 = vld [vmem:[%s1 + $0x190] sm:$0xff]
    %v86 = vld [vmem:[%s1 + $0x198] sm:$0xff]
    %v87 = vld [vmem:[%s1 + $0x1a0] sm:$0xff]
    %v88 = vld [vmem:[%s1 + $0x1a8] sm:$0xff]
    %v89 = vld [vmem:[%s1 + $0x1b0] sm:$0xff]
    %v90 = vld [vmem:[%s1 + $0x1b8] sm:$0xff]
    %v91 = vld [vmem:[%s1 + $0x1c0] sm:$0xff]
    %v92 = vld [vmem:[%s1 + $0x1c8] sm:$0xff]
    %v93 = vld [vmem:[%s1 + $0x1d0] sm:$0xff]
    %v94 = vld [vmem:[%s1 + $0x1d8] sm:$0xff]
    %v95 = vld [vmem:[%s1 + $0x1e0] sm:$0xff]
    %v96 = vld [vmem:[%s1 + $0x1e8] sm:$0xff]
    %v97 = vld [vmem:[%s1 + $0x1f0] sm:$0xff]
    %v98 = vld [vmem:[%s1 + $0x1f8] sm:$0xff]
    %v99 = vld [vmem:[%s1 + $0x200] sm:$0xff]
    %v100 = vld [vmem:[%s1 + $0x208] sm:$0xff]
    %v101 = vld [vmem:[%s1 + $0x210] sm:$0xff]
    %v102 = vld [vmem:[%s1 + $0x218] sm:$0xff]
    %v103 = vld [vmem:[%s1 + $0x220] sm:$0xff]
    %v104 = vld [vmem:[%s1 + $0x228] sm:$0xff]
    %v105 = vld [vmem:[%s1 + $0x230] sm:$0xff]
    %v106 = vld [vmem:[%s1 + $0x238] sm:$0xff]
    %v107 = vld [vmem:[%s1 + $0x240] sm:$0xff]
    %v108 = vld [vmem:[%s1 + $0x248] sm:$0xff]
    %v109 = vld [vmem:[%s1 + $0x250] sm:$0xff]
    %v110 = vld [vmem:[%s1 + $0x258] sm:$0xff]
    %v111 = vld [vmem:[%s1 + $0x260] sm:$0xff]
    %v112 = vld [vmem:[%s1 + $0x268] sm:$0xff]
    %v113 = vld [vmem:[%s1 + $0x270] sm:$0xff]
    %v114 = vld [vmem:[%s1 + $0x278] sm:$0xff]
    %v115 = vld [vmem:[%s1 + $0x280] sm:$0xff]
    %v116 = vld [vmem:[%s1 + $0x288] sm:$0xff]
    %v117 = vld [vmem:[%s1 + $0x290] sm:$0xff]
    %v118 = vld [vmem:[%s1 + $0x298] sm:$0xff]
    %v119 = vld [vmem:[%s1 + $0x2a0] sm:$0xff]
    %v120 = vld [vmem:[%s1 + $0x2a8] sm:$0xff]
    %v121 = vld [vmem:[%s1 + $0x2b0] sm:$0xff]
    %v122 = vld [vmem:[%s1 + $0x2b8] sm:$0xff]
    %v123 = vld [vmem:[%s1 + $0x2c0] sm:$0xff]
    %v124 = vld [vmem:[%s1 + $0x2c8] sm:$0xff]
    %v125 = vld [vmem:[%s1 + $0x2d0] sm:$0xff]
    %v126 = vld [vmem:[%s1 + $0x2d8] sm:$0xff]
    %v127 = vld [vmem:[%s1 + $0x2e0] sm:$0xff]
    %v128 = vld [vmem:[%s1 + $0x2e8] sm:$0xff]
    %v129 = vld [vmem:[%s1 + $0x2f0] sm:$0xff]
    %v130 = vld [vmem:[%s1 + $0x2f8] sm:$0xff]
    %v131 = vld [vmem:[%s1 + $0x300] sm:$0xff]
    %v132 = vld [vmem:[%s1 + $0x308] sm:$0xff]
    %v133 = vld [vmem:[%s2] sm:$0x1]
    %v135 = vlaneseq
    %v136 = vshrl.u32 %v135, 7
    %v137 = vsub.s32 0, %v136
    %v138 = vrot.slane %v133, %v137
    %vm140 = vcmask 130048
    %v142 = vsel %vm140, %v27, 0
    %v145 = vsel %vm140, %v34, 0
    %147 = vmatprep.subr.mxu0 0.0
    %148 = vmatpush1.msra.mxu0 %v50
    %149 = vmatprep.subr.mxu0 0.0
    %150 = vmatpush1.msra.mxu0 %v49
    %151 = vmatprep.subr.mxu0 0.0
    %152 = vmatpush1.msra.mxu0 %v48
    %153 = vmatprep.subr.mxu0 0.0
    %154 = vmatpush1.msra.mxu0 %v47
    %155 = vmatprep.subr.mxu0 0.0
    %156 = vmatpush1.msra.mxu0 %v46
    %157 = vmatprep.subr.mxu0 0.0
    %158 = vmatpush1.msra.mxu0 %v45
    %159 = vmatprep.subr.mxu0 0.0
    %160 = vmatpush1.msra.mxu0 %v44
    %161 = vmatprep.subr.mxu0 0.0
    %162 = vmatpush1.msra.mxu0 %v43
    %163 = vmatprep.subr.mxu0 0.0
    %164 = vmatpush1.msra.mxu0 %v42
    %165 = vmatprep.subr.mxu0 0.0
    %166 = vmatpush1.msra.mxu0 %v41
    %167 = vmatprep.subr.mxu0 0.0
    %168 = vmatpush1.msra.mxu0 %v40
    %169 = vmatprep.subr.mxu0 0.0
    %170 = vmatpush1.msra.mxu0 %v39
    %171 = vmatprep.subr.mxu0 0.0
    %172 = vmatpush1.msra.mxu0 %v38
    %173 = vmatprep.subr.mxu0 0.0
    %174 = vmatpush1.msra.mxu0 %v37
    %175 = vmatprep.subr.mxu0 0.0
    %176 = vmatpush1.msra.mxu0 %v36
    %177 = vmatprep.subr.mxu0 0.0
    %178 = vmatpush1.msra.mxu0 %v35
    %179 = vmatprep.subr.mxu0 0.0
    %180 = vmatpush2.msra.mxu0 %v66
    %181 = vmatprep.subr.mxu0 0.0
    %182 = vmatpush2.msra.mxu0 %v65
    %183 = vmatprep.subr.mxu0 0.0
    %184 = vmatpush2.msra.mxu0 %v64
    %185 = vmatprep.subr.mxu0 0.0
    %186 = vmatpush2.msra.mxu0 %v63
    %187 = vmatprep.subr.mxu0 0.0
    %188 = vmatpush2.msra.mxu0 %v62
    %189 = vmatprep.subr.mxu0 0.0
    %190 = vmatpush2.msra.mxu0 %v61
    %191 = vmatprep.subr.mxu0 0.0
    %192 = vmatpush2.msra.mxu0 %v60
    %193 = vmatprep.subr.mxu0 0.0
    %194 = vmatpush2.msra.mxu0 %v59
    %195 = vmatprep.subr.mxu0 0.0
    %196 = vmatpush2.msra.mxu0 %v58
    %197 = vmatprep.subr.mxu0 0.0
    %198 = vmatpush2.msra.mxu0 %v57
    %199 = vmatprep.subr.mxu0 0.0
    %200 = vmatpush2.msra.mxu0 %v56
    %201 = vmatprep.subr.mxu0 0.0
    %202 = vmatpush2.msra.mxu0 %v55
    %203 = vmatprep.subr.mxu0 0.0
    %204 = vmatpush2.msra.mxu0 %v54
    %205 = vmatprep.subr.mxu0 0.0
    %206 = vmatpush2.msra.mxu0 %v53
    %207 = vmatprep.subr.mxu0 0.0
    %208 = vmatpush2.msra.mxu0 %v52
    %209 = vmatprep.subr.mxu0 0.0
    %210 = vmatpush2.msra.mxu0 %v51
    %211 = vmatprep.mubr.f32.mxu0 %v22
    %212 = vmatmul.mubr.f32.gmra.mxu0 %v21
    %v213 = vpop.f32.mrf.mxu0
    %v214 = vadd.f32 %v138, %v213
    %v215 = vpop.f32.mrf.mxu0
    %216 = vmatprep.mubr.f32.mxu0 %v29
    %217 = vmatmul.mubr.f32.gmra.mxu0 %v28
    %v218 = vpop.f32.mrf.mxu0
    %v219 = vadd.f32 %v138, %v218
    %v220 = vpop.f32.mrf.mxu0
    %221 = vdwg.mxu0
    %222 = vmatprep.subr.mxu0 0.0
    %223 = vmatpush1.msra.mxu0 %v82
    %224 = vmatprep.subr.mxu0 0.0
    %225 = vmatpush1.msra.mxu0 %v81
    %226 = vmatprep.subr.mxu0 0.0
    %227 = vmatpush1.msra.mxu0 %v80
    %228 = vmatprep.subr.mxu0 0.0
    %229 = vmatpush1.msra.mxu0 %v79
    %230 = vmatprep.subr.mxu0 0.0
    %231 = vmatpush1.msra.mxu0 %v78
    %232 = vmatprep.subr.mxu0 0.0
    %233 = vmatpush1.msra.mxu0 %v77
    %234 = vmatprep.subr.mxu0 0.0
    %235 = vmatpush1.msra.mxu0 %v76
    %236 = vmatprep.subr.mxu0 0.0
    %237 = vmatpush1.msra.mxu0 %v75
    %238 = vmatprep.subr.mxu0 0.0
    %239 = vmatpush1.msra.mxu0 %v74
    %240 = vmatprep.subr.mxu0 0.0
    %241 = vmatpush1.msra.mxu0 %v73
    %242 = vmatprep.subr.mxu0 0.0
    %243 = vmatpush1.msra.mxu0 %v72
    %244 = vmatprep.subr.mxu0 0.0
    %245 = vmatpush1.msra.mxu0 %v71
    %246 = vmatprep.subr.mxu0 0.0
    %247 = vmatpush1.msra.mxu0 %v70
    %248 = vmatprep.subr.mxu0 0.0
    %249 = vmatpush1.msra.mxu0 %v69
    %250 = vmatprep.subr.mxu0 0.0
    %251 = vmatpush1.msra.mxu0 %v68
    %252 = vmatprep.subr.mxu0 0.0
    %253 = vmatpush1.msra.mxu0 %v67
    %254 = vmatprep.subr.mxu0 0.0
    %255 = vmatpush2.msra.mxu0 %v98
    %256 = vmatprep.subr.mxu0 0.0
    %257 = vmatpush2.msra.mxu0 %v97
    %258 = vmatprep.subr.mxu0 0.0
    %259 = vmatpush2.msra.mxu0 %v96
    %260 = vmatprep.subr.mxu0 0.0
    %261 = vmatpush2.msra.mxu0 %v95
    %262 = vmatprep.subr.mxu0 0.0
    %263 = vmatpush2.msra.mxu0 %v94
    %264 = vmatprep.subr.mxu0 0.0
    %265 = vmatpush2.msra.mxu0 %v93
    %266 = vmatprep.subr.mxu0 0.0
    %267 = vmatpush2.msra.mxu0 %v92
    %268 = vmatprep.subr.mxu0 0.0
    %269 = vmatpush2.msra.mxu0 %v91
    %270 = vmatprep.subr.mxu0 0.0
    %271 = vmatpush2.msra.mxu0 %v90
    %272 = vmatprep.subr.mxu0 0.0
    %273 = vmatpush2.msra.mxu0 %v89
    %274 = vmatprep.subr.mxu0 0.0
    %275 = vmatpush2.msra.mxu0 %v88
    %276 = vmatprep.subr.mxu0 0.0
    %277 = vmatpush2.msra.mxu0 %v87
    %278 = vmatprep.subr.mxu0 0.0
    %279 = vmatpush2.msra.mxu0 %v86
    %280 = vmatprep.subr.mxu0 0.0
    %281 = vmatpush2.msra.mxu0 %v85
    %282 = vmatprep.subr.mxu0 0.0
    %283 = vmatpush2.msra.mxu0 %v84
    %284 = vmatprep.subr.mxu0 0.0
    %285 = vmatpush2.msra.mxu0 %v83
    %286 = vmatprep.mubr.f32.mxu0 %v24
    %287 = vmatmul.mubr.f32.gmra.mxu0 %v23
    %v288 = vpop.f32.mrf.mxu0
    %v289 = vadd.f32 %v214, %v288
    %v290 = vpop.f32.mrf.mxu0
    %291 = vmatprep.mubr.f32.mxu0 %v31
    %292 = vmatmul.mubr.f32.gmra.mxu0 %v30
    %v293 = vpop.f32.mrf.mxu0
    %v294 = vadd.f32 %v219, %v293
    %v295 = vpop.f32.mrf.mxu0
    %296 = vdwg.mxu0
    %297 = vmatprep.subr.mxu0 0.0
    %298 = vmatpush1.msra.mxu0 %v114
    %299 = vmatprep.subr.mxu0 0.0
    %300 = vmatpush1.msra.mxu0 %v113
    %301 = vmatprep.subr.mxu0 0.0
    %302 = vmatpush1.msra.mxu0 %v112
    %303 = vmatprep.subr.mxu0 0.0
    %304 = vmatpush1.msra.mxu0 %v111
    %305 = vmatprep.subr.mxu0 0.0
    %306 = vmatpush1.msra.mxu0 %v110
    %307 = vmatprep.subr.mxu0 0.0
    %308 = vmatpush1.msra.mxu0 %v109
    %309 = vmatprep.subr.mxu0 0.0
    %310 = vmatpush1.msra.mxu0 %v108
    %311 = vmatprep.subr.mxu0 0.0
    %312 = vmatpush1.msra.mxu0 %v107
    %313 = vmatprep.subr.mxu0 0.0
    %314 = vmatpush1.msra.mxu0 %v106
    %315 = vmatprep.subr.mxu0 0.0
    %316 = vmatpush1.msra.mxu0 %v105
    %317 = vmatprep.subr.mxu0 0.0
    %318 = vmatpush1.msra.mxu0 %v104
    %319 = vmatprep.subr.mxu0 0.0
    %320 = vmatpush1.msra.mxu0 %v103
    %321 = vmatprep.subr.mxu0 0.0
    %322 = vmatpush1.msra.mxu0 %v102
    %323 = vmatprep.subr.mxu0 0.0
    %324 = vmatpush1.msra.mxu0 %v101
    %325 = vmatprep.subr.mxu0 0.0
    %326 = vmatpush1.msra.mxu0 %v100
    %327 = vmatprep.subr.mxu0 0.0
    %328 = vmatpush1.msra.mxu0 %v99
    %329 = vmatprep.subr.mxu0 0.0
    %330 = vmatpush2.msra.mxu0 %v130
    %331 = vmatprep.subr.mxu0 0.0
    %332 = vmatpush2.msra.mxu0 %v129
    %333 = vmatprep.subr.mxu0 0.0
    %334 = vmatpush2.msra.mxu0 %v128
    %335 = vmatprep.subr.mxu0 0.0
    %336 = vmatpush2.msra.mxu0 %v127
    %337 = vmatprep.subr.mxu0 0.0
    %338 = vmatpush2.msra.mxu0 %v126
    %339 = vmatprep.subr.mxu0 0.0
    %340 = vmatpush2.msra.mxu0 %v125
    %341 = vmatprep.subr.mxu0 0.0
    %342 = vmatpush2.msra.mxu0 %v124
    %343 = vmatprep.subr.mxu0 0.0
    %344 = vmatpush2.msra.mxu0 %v123
    %345 = vmatprep.subr.mxu0 0.0
    %346 = vmatpush2.msra.mxu0 %v122
    %347 = vmatprep.subr.mxu0 0.0
    %348 = vmatpush2.msra.mxu0 %v121
    %349 = vmatprep.subr.mxu0 0.0
    %350 = vmatpush2.msra.mxu0 %v120
    %351 = vmatprep.subr.mxu0 0.0
    %352 = vmatpush2.msra.mxu0 %v119
    %353 = vmatprep.subr.mxu0 0.0
    %354 = vmatpush2.msra.mxu0 %v118
    %355 = vmatprep.subr.mxu0 0.0
    %356 = vmatpush2.msra.mxu0 %v117
    %357 = vmatprep.subr.mxu0 0.0
    %358 = vmatpush2.msra.mxu0 %v116
    %359 = vmatprep.subr.mxu0 0.0
    %360 = vmatpush2.msra.mxu0 %v115
    %361 = vmatprep.mubr.f32.mxu0 %v26
    %362 = vmatmul.mubr.f32.gmra.mxu0 %v25
    %v363 = vpop.f32.mrf.mxu0
    %v364 = vadd.f32 %v289, %v363
    %v365 = vpop.f32.mrf.mxu0
    %366 = vmatprep.mubr.f32.mxu0 %v33
    %367 = vmatmul.mubr.f32.gmra.mxu0 %v32
    %v368 = vpop.f32.mrf.mxu0
    %v369 = vadd.f32 %v294, %v368
    %v370 = vpop.f32.mrf.mxu0
    %371 = vdwg.mxu0
    %372 = vmatprep.subr.mxu0 0.0
    %373 = vmatpush1.msra.mxu0 0.0
    %374 = vmatprep.subr.mxu0 0.0
    %375 = vmatpush1.msra.mxu0 0.0
    %376 = vmatprep.subr.mxu0 0.0
    %377 = vmatpush1.msra.mxu0 0.0
    %378 = vmatprep.subr.mxu0 0.0
    %379 = vmatpush1.msra.mxu0 0.0
    %380 = vmatprep.subr.mxu0 0.0
    %381 = vmatpush1.msra.mxu0 0.0
    %382 = vmatprep.subr.mxu0 0.0
    %383 = vmatpush1.msra.mxu0 0.0
    %384 = vmatprep.subr.mxu0 0.0
    %385 = vmatpush1.msra.mxu0 0.0
    %386 = vmatprep.subr.mxu0 0.0
    %387 = vmatpush1.msra.mxu0 0.0
    %388 = vmatprep.subr.mxu0 0.0
    %389 = vmatpush1.msra.mxu0 0.0
    %390 = vmatprep.subr.mxu0 0.0
    %391 = vmatpush1.msra.mxu0 0.0
    %392 = vmatprep.subr.mxu0 0.0
    %393 = vmatpush1.msra.mxu0 0.0
    %394 = vmatprep.subr.mxu0 0.0
    %395 = vmatpush1.msra.mxu0 0.0
    %396 = vmatprep.subr.mxu0 0.0
    %397 = vmatpush1.msra.mxu0 0.0
    %398 = vmatprep.subr.mxu0 0.0
    %399 = vmatpush1.msra.mxu0 0.0
    %400 = vmatprep.subr.mxu0 0.0
    %401 = vmatpush1.msra.mxu0 %v132
    %402 = vmatprep.subr.mxu0 0.0
    %403 = vmatpush1.msra.mxu0 %v131
    %404 = vmatprep.subr.mxu0 0.0
    %405 = vmatpush2.msra.mxu0 0.0
    %406 = vmatprep.subr.mxu0 0.0
    %407 = vmatpush2.msra.mxu0 0.0
    %408 = vmatprep.subr.mxu0 0.0
    %409 = vmatpush2.msra.mxu0 0.0
    %410 = vmatprep.subr.mxu0 0.0
    %411 = vmatpush2.msra.mxu0 0.0
    %412 = vmatprep.subr.mxu0 0.0
    %413 = vmatpush2.msra.mxu0 0.0
    %414 = vmatprep.subr.mxu0 0.0
    %415 = vmatpush2.msra.mxu0 0.0
    %416 = vmatprep.subr.mxu0 0.0
    %417 = vmatpush2.msra.mxu0 0.0
    %418 = vmatprep.subr.mxu0 0.0
    %419 = vmatpush2.msra.mxu0 0.0
    %420 = vmatprep.subr.mxu0 0.0
    %421 = vmatpush2.msra.mxu0 0.0
    %422 = vmatprep.subr.mxu0 0.0
    %423 = vmatpush2.msra.mxu0 0.0
    %424 = vmatprep.subr.mxu0 0.0
    %425 = vmatpush2.msra.mxu0 0.0
    %426 = vmatprep.subr.mxu0 0.0
    %427 = vmatpush2.msra.mxu0 0.0
    %428 = vmatprep.subr.mxu0 0.0
    %429 = vmatpush2.msra.mxu0 0.0
    %430 = vmatprep.subr.mxu0 0.0
    %431 = vmatpush2.msra.mxu0 0.0
    %432 = vmatprep.subr.mxu0 0.0
    %433 = vmatpush2.msra.mxu0 0.0
    %434 = vmatprep.subr.mxu0 0.0
    %435 = vmatpush2.msra.mxu0 0.0
    %436 = vmatprep.mubr.f32.mxu0 0.0
    %437 = vmatmul.mubr.f32.gmra.mxu0 %v142
    %v438 = vpop.f32.mrf.mxu0
    %v439 = vadd.f32 %v364, %v438
    %v440 = vpop.f32.mrf.mxu0
    %441 = vmatprep.mubr.f32.mxu0 0.0
    %442 = vmatmul.mubr.f32.gmra.mxu0 %v145
    %v443 = vpop.f32.mrf.mxu0
    %v444 = vadd.f32 %v369, %v443
    %v445 = vpop.f32.mrf.mxu0
    %446 = vdwg.mxu0
    %v447 = vtanh.pop %v439
    %v448 = vtanh.pop %v444
    %v449 = vld [vmem:[%s3] sm:$0xff]
    %v450 = vld [vmem:[%s3 + $0x8] sm:$0xff]
    %v451 = vld [vmem:[%s3 + $0x10] sm:$0xff]
    %v452 = vld [vmem:[%s3 + $0x18] sm:$0xff]
    %v453 = vld [vmem:[%s3 + $0x20] sm:$0xff]
    %v454 = vld [vmem:[%s3 + $0x28] sm:$0xff]
    %v455 = vld [vmem:[%s3 + $0x30] sm:$0xff]
    %v456 = vld [vmem:[%s3 + $0x38] sm:$0xff]
    %v457 = vld [vmem:[%s3 + $0x40] sm:$0xff]
    %v458 = vld [vmem:[%s3 + $0x48] sm:$0xff]
    %v459 = vld [vmem:[%s3 + $0x50] sm:$0xff]
    %v460 = vld [vmem:[%s3 + $0x58] sm:$0xff]
    %v461 = vld [vmem:[%s3 + $0x60] sm:$0xff]
    %v462 = vld [vmem:[%s3 + $0x68] sm:$0xff]
    %v463 = vld [vmem:[%s3 + $0x70] sm:$0xff]
    %v464 = vld [vmem:[%s3 + $0x78] sm:$0xff]
    %v465 = vld [vmem:[%s4] sm:$0x1]
    %v467 = vlaneseq
    %v468 = vshrl.u32 %v467, 7
    %v469 = vsub.s32 0, %v468
    %v470 = vrot.slane %v465, %v469
    %472 = vmatprep.subr.mxu0 0.0
    %473 = vmatpush1.msra.mxu0 %v464
    %474 = vmatprep.subr.mxu0 0.0
    %475 = vmatpush1.msra.mxu0 %v463
    %476 = vmatprep.subr.mxu0 0.0
    %477 = vmatpush1.msra.mxu0 %v462
    %478 = vmatprep.subr.mxu0 0.0
    %479 = vmatpush1.msra.mxu0 %v461
    %480 = vmatprep.subr.mxu0 0.0
    %481 = vmatpush1.msra.mxu0 %v460
    %482 = vmatprep.subr.mxu0 0.0
    %483 = vmatpush1.msra.mxu0 %v459
    %484 = vmatprep.subr.mxu0 0.0
    %485 = vmatpush1.msra.mxu0 %v458
    %486 = vmatprep.subr.mxu0 0.0
    %487 = vmatpush1.msra.mxu0 %v457
    %488 = vmatprep.subr.mxu0 0.0
    %489 = vmatpush1.msra.mxu0 %v456
    %490 = vmatprep.subr.mxu0 0.0
    %491 = vmatpush1.msra.mxu0 %v455
    %492 = vmatprep.subr.mxu0 0.0
    %493 = vmatpush1.msra.mxu0 %v454
    %494 = vmatprep.subr.mxu0 0.0
    %495 = vmatpush1.msra.mxu0 %v453
    %496 = vmatprep.subr.mxu0 0.0
    %497 = vmatpush1.msra.mxu0 %v452
    %498 = vmatprep.subr.mxu0 0.0
    %499 = vmatpush1.msra.mxu0 %v451
    %500 = vmatprep.subr.mxu0 0.0
    %501 = vmatpush1.msra.mxu0 %v450
    %502 = vmatprep.subr.mxu0 0.0
    %503 = vmatpush1.msra.mxu0 %v449
    %504 = vmatprep.subr.mxu0 0.0
    %505 = vmatpush2.msra.mxu0 0.0
    %506 = vmatprep.subr.mxu0 0.0
    %507 = vmatpush2.msra.mxu0 0.0
    %508 = vmatprep.subr.mxu0 0.0
    %509 = vmatpush2.msra.mxu0 0.0
    %510 = vmatprep.subr.mxu0 0.0
    %511 = vmatpush2.msra.mxu0 0.0
    %512 = vmatprep.subr.mxu0 0.0
    %513 = vmatpush2.msra.mxu0 0.0
    %514 = vmatprep.subr.mxu0 0.0
    %515 = vmatpush2.msra.mxu0 0.0
    %516 = vmatprep.subr.mxu0 0.0
    %517 = vmatpush2.msra.mxu0 0.0
    %518 = vmatprep.subr.mxu0 0.0
    %519 = vmatpush2.msra.mxu0 0.0
    %520 = vmatprep.subr.mxu0 0.0
    %521 = vmatpush2.msra.mxu0 0.0
    %522 = vmatprep.subr.mxu0 0.0
    %523 = vmatpush2.msra.mxu0 0.0
    %524 = vmatprep.subr.mxu0 0.0
    %525 = vmatpush2.msra.mxu0 0.0
    %526 = vmatprep.subr.mxu0 0.0
    %527 = vmatpush2.msra.mxu0 0.0
    %528 = vmatprep.subr.mxu0 0.0
    %529 = vmatpush2.msra.mxu0 0.0
    %530 = vmatprep.subr.mxu0 0.0
    %531 = vmatpush2.msra.mxu0 0.0
    %532 = vmatprep.subr.mxu0 0.0
    %533 = vmatpush2.msra.mxu0 0.0
    %534 = vmatprep.subr.mxu0 0.0
    %535 = vmatpush2.msra.mxu0 0.0
    %536 = vmatprep.mubr.f32.mxu0 0.0
    %537 = vmatmul.mubr.f32.gmra.mxu0 %v447
    %v538 = vpop.f32.mrf.mxu0
    %v539 = vadd.f32 %v470, %v538
    %v540 = vpop.f32.mrf.mxu0
    %541 = vmatprep.mubr.f32.mxu0 0.0
    %542 = vmatmul.mubr.f32.gmra.mxu0 %v448
    %v543 = vpop.f32.mrf.mxu0
    %v544 = vadd.f32 %v470, %v543
    %v545 = vpop.f32.mrf.mxu0
    %546 = vdwg.mxu0
    %547 = vmax.xlane.f32.xlu0 %v539
    %v548 = vpop.xlane.xlu0 %547
    %549 = vmax.xlane.f32.xlu0 %v544
    %v550 = vpop.xlane.xlu0 %549
    %v551 = vsub.f32 %v539, %v548
    %v552 = vsub.f32 %v544, %v550
    %v553 = vmul.f32 %v551, 1.442695
    %v554 = vpow.pop %v553
    %v555 = vmul.f32 %v552, 1.442695
    %v556 = vpow.pop %v555
    %557 = vadd.xlane.f32.xlu0 %v554
    %v558 = vpop.xlane.xlu0 %557
    %559 = vadd.xlane.f32.xlu0 %v556
    %v560 = vpop.xlane.xlu0 %559
    %v561 = vlog2.pop %v558
    %v562 = vmul.f32 %v561, 0.6931472
    %v563 = vlog2.pop %v560
    %v564 = vmul.f32 %v563, 0.6931472
    %v565 = vsub.f32 %v551, %v562
    %v566 = vsub.f32 %v552, %v564
    %567 = vst [vmem:[#allocation2] sm:$0xff] %v565
    %568 = vst [vmem:[#allocation2 + $0x8] sm:$0xff] %v566
    // Predicated region
    $region22: #{mlp_forward.1} parent=1 // pred_check
      _
    $region23: #{mlp_forward.1} parent=1 // pred_check_branch
      %570 = sbr.rel (0) target = $region25
    $region24: #{mlp_forward.1} parent=1 // pred_region
      %s572 = ssub.s32 256, 256
      %573 = vsyncadd [#allocation3], %s572
      %s574 = sshll.u32 [#allocation2], 4
      %s575 = int_to_ptr.vmem [resolvable:$true] %s574
      %580 = dma.vmem_to_hbm [thread:$0]  %s575, 256, %s5, [#allocation3], 128, 128, 8
    $region25: #{mlp_forward.1} parent=1 // pred_fallthru
      _
    // Predicated region
    $region26: #{mlp_forward.1} parent=1 // pred_check
      _
    $region27: #{mlp_forward.1} parent=1 // pred_check_branch
      %582 = sbr.rel (0) target = $region29
    $region28: #{mlp_forward.1} parent=1 // pred_region
      %583 = dma.done [#allocation3], 256
    $region29: #{mlp_forward.1} parent=1 // pred_fallthru
      _
    %584 = vsyncpa [#allocation3], 1

</llo_original>
